<compile_context>
chip_gen: v7x
topology: tpu7x:2x2x1
jax: 0.10.0
libtpu: 0.0.40
codegen_flags: <defaults>
</compile_context>

<pallas_src>
import functools

import jax
import jax.numpy as jnp
import numpy as np
from jax import lax
from jax.experimental import pallas as pl
from jax.experimental.pallas import tpu as pltpu


# ----------------------------------------------------------------------------- helpers
def _round_up(x, m):
    return -(-x // m) * m


def _tpu_generation():
    """Best-effort TPU generation (5/6/7, 0 if unknown) for dtype/tiling choices."""
    try:
        kind = jax.devices()[0].device_kind.lower()
    except Exception:
        return 0
    for g in (7, 6, 5, 4):
        if f"v{g}" in kind:
            return g
    return 0


def _pick_batch_tile(batch, tb_max, gen):
    b_pad8 = _round_up(batch, 8)
    tb = min(tb_max, b_pad8)
    # v7x has 2 TensorCores sharded along the "parallel" batch axis: prefer >= 2 tiles.
    if gen >= 7 and b_pad8 // tb < 2 and b_pad8 >= 16:
        tb = max(8, _round_up(b_pad8 // 2, 8))
    return tb


# ------------------------------------------------------------------ counts-matmul path
def _embed_mean_counts_kernel(ids_ref, table_ref, out_ref, acc_ref, *,
                              tv, vocab_size, seq_chunk, inv_seq_len,
                              onehot_dtype, mask_vocab_tail):
    # ids_ref:   (tb, S)  int32 token ids for this batch tile
    # table_ref: (tv, D)  embedding-table tile for this vocab tile
    # out_ref:   (tb, D)  output rows for this batch tile
    # acc_ref:   (tb, D)  f32 accumulator, persistent across the vocab grid axis
    v = pl.program_id(1)
    nv = pl.num_programs(1)

    @pl.when(v == 0)
    def _():
        acc_ref[...] = jnp.zeros_like(acc_ref)

    tb, seq = ids_ref.shape
    v_start = v * tv

    # One cheap (tb, S) subtraction instead of adding v_start to a full (tb, sc, tv)
    # iota every chunk; the (1, 1, tv) iota is built once per invocation and reused.
    ids_rel = ids_ref[...] - v_start
    vocab_iota = lax.broadcasted_iota(jnp.int32, (1, 1, tv), 2)

    def chunk_counts(ids_chunk):
        # (tb, sc) -> (tb, tv).  Per-chunk sums are exact in bf16 for sc <= 256;
        # cross-chunk accumulation stays in f32.
        one_hot = (ids_chunk[:, :, None] == vocab_iota).astype(onehot_dtype)
        return jnp.sum(one_hot, axis=1).astype(jnp.float32)

    counts = jnp.zeros((tb, tv), jnp.float32)
    n_chunks = seq // seq_chunk
    tail = seq - n_chunks * seq_chunk
    if n_chunks <= 4:
        # Short: static unroll (static slices, minimal code).
        for c in range(n_chunks):
            counts = counts + chunk_counts(ids_rel[:, c * seq_chunk:(c + 1) * seq_chunk])
    else:
        # Long: visible loop so only one (tb, sc, tv) intermediate is live at a time.
        def body(c, counts):
            start = pl.multiple_of(c * seq_chunk, seq_chunk)
            chunk = lax.dynamic_slice_in_dim(ids_rel, start, seq_chunk, axis=1)
            return counts + chunk_counts(chunk)
        counts = lax.fori_loop(0, n_chunks, body, counts)
    if tail > 0:
        counts = counts + chunk_counts(ids_rel[:, seq - tail:])

    tbl = table_ref[...]
    if mask_vocab_tail:
        # The last vocab tile may run past V: its out-of-bounds rows are uninitialized,
        # so zero them before the matmul (counts there are 0, but garbage*0 could be NaN).
        rows = lax.broadcasted_iota(jnp.int32, (tv, 1), 0) + v_start
        tbl = jnp.where(rows < vocab_size, tbl, jnp.zeros_like(tbl))

    # MXU: (tb, tv) @ (tv, D).  Operands are fed in the table's dtype (no redundant upcast).
    acc_ref[...] += jnp.dot(counts.astype(tbl.dtype), tbl,
                            preferred_element_type=jnp.float32)

    @pl.when(v == nv - 1)
    def _():
        out_ref[...] = (acc_ref[...] * inv_seq_len).astype(out_ref.dtype)


def _make_table_spec(tv, d, gen):
    index_map = lambda b, v: (v, 0)
    if gen == 5:
        # v5e is the most HBM-bandwidth-limited generation: one extra (tv, D) buffer
        # hides the table DMA behind the long VALU/MXU phase.
        try:
            return pl.BlockSpec((tv, d), index_map, pipeline_mode=pl.Buffered(3))
        except TypeError:  # older BlockSpec without pipeline_mode
            pass
    return pl.BlockSpec((tv, d), index_map)


def _forward_counts(ids, table, *, gen, tb_max=128, tv_max=2048, seq_chunk=None):
    batch, seq = ids.shape
    vocab, d = table.shape

    tb = _pick_batch_tile(batch, tb_max, gen)
    b_pad = _round_up(batch, tb)
    if b_pad != batch:
        # Cheap (ids only); padded rows produce garbage outputs that are sliced off.
        ids = jnp.pad(ids, ((0, b_pad - batch), (0, 0)))

    # No per-call pad of the full table: the ragged last vocab tile is masked in-kernel.
    tv = min(tv_max, _round_up(vocab, 128))
    nv = pl.cdiv(vocab, tv)

    # bf16 one-hot on v6e/v7x (bf16 VPU, MXU-native); f32 on v5e and unknown chips.
    onehot_dtype = jnp.bfloat16 if gen >= 6 else jnp.float32
    if seq_chunk is None:
        onehot_bytes = jnp.dtype(onehot_dtype).itemsize
        seq_chunk = (2 << 20) // max(1, tb * tv * onehot_bytes)   # ~2 MiB one-hot temp
        seq_chunk = max(8, min(seq_chunk, 256))
    seq_chunk = max(1, min(seq_chunk, seq))

    kernel = functools.partial(
        _embed_mean_counts_kernel,
        tv=tv,
        vocab_size=vocab,
        seq_chunk=seq_chunk,
        inv_seq_len=1.0 / float(seq),      # torch .mean(dim=1) divides by full S
        onehot_dtype=onehot_dtype,
        mask_vocab_tail=(vocab % tv != 0),
    )

    out = pl.pallas_call(
        kernel,
        out_shape=jax.ShapeDtypeStruct((b_pad, d), table.dtype),
        grid_spec=pltpu.PrefetchScalarGridSpec(
            num_scalar_prefetch=0,
            grid=(b_pad // tb, nv),
            in_specs=[
                pl.BlockSpec((tb, seq), lambda b, v: (b, 0)),   # ids for this batch tile
                _make_table_spec(tv, d, gen),                   # streaming vocab tile
            ],
            out_specs=pl.BlockSpec((tb, d), lambda b, v: (b, 0)),
            scratch_shapes=[pltpu.VMEM((tb, d), jnp.float32)],
        ),
        compiler_params=pltpu.CompilerParams(
            dimension_semantics=("parallel", "arbitrary"),
        ),
    )(ids, table)
    return out[:batch]


# ------------------------------------------------------------------------- gather path
def _embed_mean_gather_kernel(ids_smem, table_ref, out_ref, *, tb, inv_seq_len):
    # ids_smem:  (B_pad, S) int32, scalar-prefetched into SMEM (scalar-indexable)
    # table_ref: (V, D) embedding table, VMEM-resident (constant block index)
    # out_ref:   (tb, D) output rows for this batch tile
    b0 = pl.program_id(0) * tb
    seq_len = ids_smem.shape[1]
    d = table_ref.shape[1]

    @pl.loop(0, tb)
    def _(bb):
        def body(s, acc):
            tok = ids_smem[b0 + bb, s]
            return acc + table_ref[pl.ds(tok, 1), :].astype(jnp.float32)
        acc = lax.fori_loop(0, seq_len, body, jnp.zeros((1, d), jnp.float32))
        out_ref[pl.ds(bb, 1), :] = (acc * inv_seq_len).astype(out_ref.dtype)


def _forward_gather(ids, table, *, gen, tb=8):
    batch, seq = ids.shape
    vocab, d = table.shape

    b_pad = _round_up(batch, tb)
    if b_pad != batch:
        # Pad with token 0 (a valid row) so SMEM scalar reads never go out of bounds;
        # the padded output rows are sliced off below.
        ids = jnp.pad(ids, ((0, b_pad - batch), (0, 0)))

    table_bytes = vocab * d * jnp.dtype(table.dtype).itemsize
    # Whole table is VMEM-resident (constant block index => fetched once); leave room
    # for the (possibly double-buffered) table plus small ids/out buffers.
    vmem_limit = min(2 * table_bytes + (8 << 20),
                     (56 << 20) if gen >= 7 else (100 << 20))
    vmem_limit = int(max(vmem_limit, 24 << 20))

    kernel = functools.partial(_embed_mean_gather_kernel,
                               tb=tb, inv_seq_len=1.0 / float(seq))

    # TODO(synk): for tables too large for VMEM (or very large B*S ids in SMEM), switch
    # to per-batch-tile SMEM id tiles plus 4-8 outstanding manual row-block DMAs.
    out = pl.pallas_call(
        kernel,
        out_shape=jax.ShapeDtypeStruct((b_pad, d), table.dtype),
        grid_spec=pltpu.PrefetchScalarGridSpec(
            num_scalar_prefetch=1,                                  # token ids -> SMEM
            grid=(b_pad // tb,),
            in_specs=[pl.BlockSpec((vocab, d), lambda b, ids_s: (0, 0))],
            out_specs=pl.BlockSpec((tb, d), lambda b, ids_s: (b, 0)),
        ),
        compiler_params=pltpu.CompilerParams(
            dimension_semantics=("parallel",),
            vmem_limit_bytes=vmem_limit,
        ),
    )(ids, table)
    return out[:batch]


# --------------------------------------------------------------------------- dispatcher
def _choose_method(batch, seq, vocab, d, dtype, gen):
    table_bytes = vocab * d * jnp.dtype(dtype).itemsize
    vmem_budget = (48 << 20) if gen >= 7 else (96 << 20)
    gather_fits = 2 * table_bytes + (8 << 20) <= vmem_budget
    tb = min(128, _round_up(batch, 8))
    # Counts-matmul costs O(B*S*V) VALU + O(B/tb * V * D) table HBM bytes, so it only
    # pays off for small vocabularies (roughly S*tb >= V); otherwise gather.
    if gather_fits and seq * tb < vocab:
        return "gather"
    return "counts"


def text_embedding_forward(token_ids, emb_table, *, method="auto",
                           tb_max=128, tv_max=2048, seq_chunk=None):
    """token_ids: (B, S) int; emb_table: (V, D) float -> (B, D) in emb_table.dtype."""
    batch, seq = token_ids.shape
    vocab, d = emb_table.shape
    token_ids = token_ids.astype(jnp.int32)
    gen = _tpu_generation()

    if method == "auto":
        method = _choose_method(batch, seq, vocab, d, emb_table.dtype, gen)

    if method == "gather":
        return _forward_gather(token_ids, emb_table, gen=gen)
    return _forward_counts(token_ids, emb_table, gen=gen, tb_max=tb_max,
                           tv_max=tv_max, seq_chunk=seq_chunk)


# -------------------------------------------------------------------------------- test
if __name__ == "__main__":
    # Small deterministic setup consistent with the module (embedding_dim=128 default;
    # vocab shrunk for a synthetic test).
    vocab_size = 512
    embedding_dim = 128
    batch = 2
    seq_len = 8

    key = jax.random.PRNGKey(0)
    k_emb, k_ids = jax.random.split(key)

    # nn.Embedding default init: N(0, 1); padding_idx=0 -> row 0 zeroed.
    emb_table = jax.random.normal(k_emb, (vocab_size, embedding_dim), dtype=jnp.float32)
    emb_table = emb_table.at[0].set(0.0)

    token_ids = jax.random.randint(k_ids, (batch, seq_len), 0, vocab_size, dtype=jnp.int32)
    token_ids = token_ids.at[0, -2:].set(0)   # explicit padding tokens
    token_ids = token_ids.at[1, -1:].set(0)

    # Reference (pure JAX) of the PyTorch semantics.
    ref = jnp.take(emb_table, token_ids, axis=0).mean(axis=1)

    out_auto = text_embedding_forward(token_ids, emb_table)                    # -> gather path here
    out_counts = text_embedding_forward(token_ids, emb_table, method="counts")  # counts-matmul path
    jax.block_until_ready((out_auto, out_counts))

    np.testing.assert_allclose(np.asarray(out_auto), np.asarray(ref), rtol=1e-5, atol=1e-5)
    np.testing.assert_allclose(np.asarray(out_counts), np.asarray(ref), rtol=1e-5, atol=1e-5)

    print("KERNEL_OK")
</pallas_src>

<mosaic_0001>
module attributes {stable_mosaic.version = 11 : i64} {
  func.func @_embed_mean_gather_kernel(%arg0: i32, %arg1: memref<8x8xi32, #tpu.memory_space<smem>>, %arg2: memref<512x128xf32, #tpu.memory_space<vmem>>, %arg3: memref<8x128xf32, #tpu.memory_space<vmem>>) attributes {dimension_semantics = [#tpu.dimension_semantics<parallel>], iteration_bounds = array<i64: 1>, scalar_prefetch = 1 : i64, scratch_operands = 0 : i64, tpu.core_type = #tpu.core_type<tc>, window_params = [{pipeline_mode = #tpu.pipeline_mode<synchronous>, transform_indices = @transform_0, window_bounds = array<i64: 512, 128>}, {transform_indices = @transform_1, window_bounds = array<i64: 8, 128>}]} {
    %c8_i32 = arith.constant 8 : i32
    %0 = arith.muli %arg0, %c8_i32 : i32
    %c0_i32 = arith.constant 0 : i32
    %c8_i32_0 = arith.constant 8 : i32
    %1 = arith.addi %c0_i32, %c8_i32_0 : i32
    %c1_i32 = arith.constant 1 : i32
    scf.for %arg4 = %c0_i32 to %1 step %c1_i32  : i32 {
      %c1_i32_2 = arith.constant 1 : i32
      %2 = arith.muli %arg4, %c1_i32_2 : i32
      %c0_i32_3 = arith.constant 0 : i32
      %3 = arith.addi %c0_i32_3, %2 : i32
      %cst = arith.constant 0.000000e+00 : f32
      %4 = vector.broadcast %cst : f32 to vector<1x128xf32>
      %c0_i32_4 = arith.constant 0 : i32
      %c8_i32_5 = arith.constant 8 : i32
      %5 = arith.addi %c0_i32_4, %c8_i32_5 : i32
      %c1_i32_6 = arith.constant 1 : i32
      %6 = scf.for %arg5 = %c0_i32_4 to %5 step %c1_i32_6 iter_args(%arg6 = %4) -> (vector<1x128xf32>)  : i32 {
        %11 = arith.addi %0, %3 : i32
        %12 = arith.index_cast %11 : i32 to index
        %13 = arith.index_cast %arg5 : i32 to index
        %14 = memref.load %arg1[%12, %13] : memref<8x8xi32, #tpu.memory_space<smem>>
        %15 = arith.index_cast %14 : i32 to index
        %c0_9 = arith.constant 0 : index
        %16 = vector.load %arg2[%15, %c0_9] : memref<512x128xf32, #tpu.memory_space<vmem>>, vector<1x128xf32>
        %17 = arith.addf %arg6, %16 : vector<1x128xf32>
        scf.yield %17 : vector<1x128xf32>
      }
      %c8_i32_7 = arith.constant 8 : i32
      %cst_8 = arith.constant 1.250000e-01 : f32
      %7 = vector.broadcast %cst_8 : f32 to vector<1x128xf32>
      %8 = arith.mulf %6, %7 : vector<1x128xf32>
      %9 = arith.index_cast %3 : i32 to index
      %c0 = arith.constant 0 : index
      %10 = vector.load %arg3[%9, %c0] : memref<8x128xf32, #tpu.memory_space<vmem>>, vector<1x128xf32>
      tpu.vector_store %arg3[%9, %c0], %8 {strides = array<i32>} : memref<8x128xf32, #tpu.memory_space<vmem>>, vector<1x128xf32>,
    }
    %c8_i32_1 = arith.constant 8 : i32
    return
  }
  func.func @transform_0(%arg0: i32, %arg1: memref<8x8xi32, #tpu.memory_space<smem>>) -> (i32, i32) {
    %c0_i32 = arith.constant 0 : i32
    %c0_i32_0 = arith.constant 0 : i32
    %c0_i32_1 = arith.constant 0 : i32
    return %c0_i32, %c0_i32_0 : i32, i32
  }
  func.func @transform_1(%arg0: i32, %arg1: memref<8x8xi32, #tpu.memory_space<smem>>) -> (i32, i32) {
    %c0_i32 = arith.constant 0 : i32
    %c0_i32_0 = arith.constant 0 : i32
    return %arg0, %c0_i32 : i32, i32
  }
}

</mosaic_0001>

<llo_original>
// kernel: tpu_custom_call.1
$region0: #{tpu_custom_call.1}
  #allocation0 [shape = 'u32[]', space=smem, size = 0x4, offset = 0x4, fixed_abs, tag = 'smem constant byte address 0x4 - core index']
  #allocation1 [shape = 'u32[144,128]{1,0:T(1,128)}', space=vmem, size = 0x12000, scoped, tag = 'internal scratch']
  #allocation2 [shape = 's32[1]{0}', space=sflag, size = 0x4, scoped, tag = 'scoped memory for tpu_custom_call.1']
  #allocation3 [shape = 'u8[4096]{0}', space=smem, size = 0x1000, scoped, tag = 'prefetched SMEM operand 0']
  %s0 = inlined_call_operand.hbm [shape: s32[8,8], index: 0, kind: input, shape index: {}]
  %s1 = inlined_call_operand.hbm [shape: f32[512,128], index: 1, kind: input, shape index: {}]
  %s2 = inlined_call_operand.hbm [shape: f32[8,128], index: 2, kind: output, shape index: {}]
  %s3 = sld [smem:[#allocation0]]
  $region32: #{tpu_custom_call.1} parent=0
    _
  %s5 = ssub.s32 1, %s3
  %s6 = scalar_select 0, %s5, %s3
  %8 = dma.hbm_to_smem %s0, 128, [#allocation3], [#allocation2]
  %9 = dma.done [#allocation2], 128
  %10 = sfence
  $region1: #{tpu_custom_call.1} parent=0
    #allocation4 [shape = 'u8[262144]{0}', space=vmem, size = 0x40000, scoped, tag = 'input window, operand 1, single buffered']
    #allocation5 [shape = 's32[1]{0}', space=sflag, size = 0x4, scoped, tag = 'scoped memory for tpu_custom_call.1']
    #allocation6 [shape = 's32[1]{0}', space=sflag, size = 0x4, scoped, tag = 'scoped memory for tpu_custom_call.1']
    #allocation7 [shape = 'u8[4096]{0}', space=vmem, size = 0x1000, scoped, tag = 'output window, operand 0, single buffered']
    %11 = vsyncpa [#allocation5], 0
    %12 = vsyncpa [#allocation6], 0
    // Predicated region
    $region2: #{tpu_custom_call.1} parent=1 // pred_check
      _
    $region3: #{tpu_custom_call.1} parent=1 // pred_check_branch
      %14 = sbr.rel (0) target = $region5
    $region4: #{tpu_custom_call.1} parent=1 // pred_region
      %s16 = ssub.s32 8192, 8192
      %17 = vsyncadd [#allocation5], %s16
      %s18 = sshll.u32 [#allocation4], 4
      %s19 = int_to_ptr.vmem [resolvable:$true] %s18
      %24 = dma.hbm_to_vmem [thread:$0]  %s1, 8192, %s19, [#allocation5], 128, 128, 8
    $region5: #{tpu_custom_call.1} parent=1 // pred_fallthru
      _
    // Predicated region
    $region6: #{tpu_custom_call.1} parent=1 // pred_check
      _
    $region7: #{tpu_custom_call.1} parent=1 // pred_check_branch
      %26 = sbr.rel (0) target = $region9
    $region8: #{tpu_custom_call.1} parent=1 // pred_region
      %27 = dma.done [#allocation5], 8192
    $region9: #{tpu_custom_call.1} parent=1 // pred_fallthru
      _
    %s28 = smul.u32 0, 8
    loop: start=0, step=1, limit=8
    $region10: #{tpu_custom_call.1} parent=1 // loop_pre_header
      _
    $region11: #{tpu_custom_call.1} parent=1 // loop_header
      %s30 = sphi 0, %s34
      %p31 = scmp.ge.s32.totalorder %s30, 8
    $region12: #{tpu_custom_call.1} parent=1 // loop_header_branch
      %33 = sbr.rel (%p31) target = $region16
    $region13: #{tpu_custom_call.1} parent=1 // loop_body
      loop: start=0, step=1, limit=8
      $region17: #{tpu_custom_call.1} parent=13 // loop_pre_header
        _
      $region18: #{tpu_custom_call.1} parent=13 // loop_header
        %s36 = sphi 0, %s40
        %p37 = scmp.ge.s32.totalorder %s36, 8
        %v41 = vphi 0.0, %v53
      $region19: #{tpu_custom_call.1} parent=13 // loop_header_branch
        %39 = sbr.rel (%p37) target = $region23
      $region20: #{tpu_custom_call.1} parent=13 // loop_body
        %s42 = sadd.s32 %s28, %s30
        %s43 = sshra.s32 %s36, 7
        %s44 = sand.u32 %s36, 127
        %s45 = sadd.s32 %s43, %s42
        %s46 = smul.u32 %s45, 128
        %s47 = sshra.s32 %s36, 7
        %s48 = sand.u32 %s36, 127
        %s49 = sadd.s32 %s46, %s48
        %s50 = sld [smem:[#allocation3 + %s49]]
        %s51 = scalar_lea.vmem [#allocation4], %s50
        %v52 = vld [vmem:[%s51] sm:$0x1]
        %v53 = vadd.f32 %v41, %v52
      $region21: #{tpu_custom_call.1} parent=13 // loop_footer
        %s40 = sadd.s32 1, %s36
      $region22: #{tpu_custom_call.1} parent=13 // loop_footer_branch
        %35 = sbr.rel target = $region18
      $region23: #{tpu_custom_call.1} parent=13 // loop_exit
        _
      %v54 = vmul.f32 %v41, 0.125
      %s55 = scalar_lea.vmem [#allocation7], %s30
      %56 = vst [vmem:[%s55] sm:$0x1] %v54
    $region14: #{tpu_custom_call.1} parent=1 // loop_footer
      %s34 = sadd.s32 1, %s30
    $region15: #{tpu_custom_call.1} parent=1 // loop_footer_branch
      %29 = sbr.rel target = $region11
    $region16: #{tpu_custom_call.1} parent=1 // loop_exit
      _
    // Predicated region
    $region24: #{tpu_custom_call.1} parent=1 // pred_check
      _
    $region25: #{tpu_custom_call.1} parent=1 // pred_check_branch
      %58 = sbr.rel (0) target = $region27
    $region26: #{tpu_custom_call.1} parent=1 // pred_region
      %s60 = ssub.s32 128, 128
      %61 = vsyncadd [#allocation6], %s60
      %s63 = sshll.u32 [#allocation7], 4
      %s64 = int_to_ptr.vmem [resolvable:$true] %s63
      %66 = dma.vmem_to_hbm [thread:$0]  %s64, 128, %s2, [#allocation6]
    $region27: #{tpu_custom_call.1} parent=1 // pred_fallthru
      _
    // Predicated region
    $region28: #{tpu_custom_call.1} parent=1 // pred_check
      _
    $region29: #{tpu_custom_call.1} parent=1 // pred_check_branch
      %68 = sbr.rel (0) target = $region31
    $region30: #{tpu_custom_call.1} parent=1 // pred_region
      %69 = dma.done [#allocation6], 128
    $region31: #{tpu_custom_call.1} parent=1 // pred_fallthru
      _
    %70 = vsyncpa [#allocation5], 1
    %71 = vsyncpa [#allocation6], 1

</llo_original>
